<compile_context>
chip_gen: v5e
topology: v5e:2x2
jax: 0.10.0
libtpu: 0.0.40
codegen_flags: <defaults>
</compile_context>

<pallas_src>
import jax
import jax.numpy as jnp
from jax import lax
from jax.experimental import pallas as pl
from jax.experimental.pallas import tpu as pltpu


def mf_kernel(uid_ref, mid_ref, utab_ref, mtab_ref, out_ref):
    """One batch tile: bf16 one-hot MXU gather + fused multiply + F-reduction.

    uid_ref, mid_ref : (1, TB) int32   — batch-tile of indices (lane-dense)
    utab_ref         : (F, n_users)  bf16 — transposed user table (VMEM resident)
    mtab_ref         : (F, n_movies) bf16 — transposed movie table (VMEM resident)
    out_ref          : (1, TB) f32    — lane-dense per-example dot products
    """
    n_users = utab_ref.shape[1]
    n_movies = mtab_ref.shape[1]
    tb = uid_ref.shape[1]

    uid = uid_ref[...]  # (1, TB)
    mid = mid_ref[...]  # (1, TB)

    # One-hot selection matrices, built directly in the matmul dtype (bf16 is
    # exact for 0/1) so there is exactly one convert per element on the VPU.
    u_onehot = (lax.broadcasted_iota(jnp.int32, (n_users, tb), 0) == uid
                ).astype(jnp.bfloat16)                      # (n_users, TB)
    m_onehot = (lax.broadcasted_iota(jnp.int32, (n_movies, tb), 0) == mid
                ).astype(jnp.bfloat16)                      # (n_movies, TB)

    # MXU gather (bf16 inputs, f32 accumulation): columns of the transposed
    # tables selected by the ids.
    u_cols = jnp.dot(utab_ref[...], u_onehot,
                     preferred_element_type=jnp.float32)    # (F, TB)
    m_cols = jnp.dot(mtab_ref[...], m_onehot,
                     preferred_element_type=jnp.float32)    # (F, TB)

    # Fused elementwise product + reduction over the factor (sublane) axis.
    out_ref[...] = jnp.sum(u_cols * m_cols, axis=0, keepdims=True)  # (1, TB)


def _vmem_cap_bytes():
    """80% of physical per-core VMEM; conservative (v7x) fallback if unknown."""
    try:
        cap = int(pltpu.get_tpu_info().vmem_capacity_bytes)
    except Exception:
        cap = 64 * 1024 * 1024
    return int(0.8 * cap)


def matrix_factorization_forward(user_ids, movie_ids, user_factors, movie_factors,
                                 *, tb=1024):
    """(user_factors(user) * movie_factors(movie)).sum(1), as in the torch module."""
    B = int(user_ids.shape[0])
    n_users, F = user_factors.shape
    n_movies = movie_factors.shape[0]

    user_ids = user_ids.astype(jnp.int32)
    movie_ids = movie_ids.astype(jnp.int32)

    vmem_cap = _vmem_cap_bytes()

    # Resident (single-buffered) bf16 tables.
    table_bytes = (n_users + n_movies) * F * 2
    if table_bytes + (8 << 20) > vmem_cap:
        # TODO(synk): HBM-resident pl.ANY + scalar-prefetch pl.Element row-gather
        # path for tables that do not fit the VMEM-resident one-hot gather.
        raise NotImplementedError(
            "Embedding tables too large for the VMEM-resident one-hot gather path.")

    # --- Batch tiling ---------------------------------------------------------
    # Lane-dense tiles of TB (multiple of 128) when B is large, otherwise a
    # single full-extent block.
    if B <= 256:
        TB = B
        Bp = B
    else:
        # Per-lane VMEM cost of the compiler-materialized temporaries:
        # bf16 one-hots + f32 gathered columns + double-buffered id/out tiles.
        per_lane_bytes = ((n_users + n_movies) * 2
                          + 2 * F * 4
                          + 3 * 4 * 2)
        avail = max(vmem_cap - table_bytes - (4 << 20), 128 * per_lane_bytes)
        tb_cap_vmem = max(128, (avail // per_lane_bytes) // 128 * 128)

        # Keep >= 2 grid steps so v7x's two TensorCores can both get work.
        chunks = -(-B // 128)
        tb_cap_split = max(128, (chunks // 2) * 128)

        TB = max(128, (min(tb, tb_cap_vmem, tb_cap_split) // 128) * 128)
        Bp = -(-B // TB) * TB

    if Bp != B:
        pad = Bp - B
        user_ids = jnp.pad(user_ids, (0, pad))    # pads with index 0 (in bounds)
        movie_ids = jnp.pad(movie_ids, (0, pad))

    uid2 = user_ids.reshape(1, Bp)
    mid2 = movie_ids.reshape(1, Bp)
    utab_t = jnp.asarray(user_factors, jnp.bfloat16).T   # (F, n_users)   bf16
    mtab_t = jnp.asarray(movie_factors, jnp.bfloat16).T  # (F, n_movies)  bf16

    grid = (Bp // TB,)

    # Explicit VMEM budget: resident (single-buffered) tables + one-hot and
    # gathered-column temporaries + double-buffered id/out tiles + slack.
    onehot_bytes = (n_users + n_movies) * TB * 2
    cols_bytes = 2 * F * TB * 4
    io_bytes = 2 * (2 * TB * 4) + 2 * (TB * 4)
    est = table_bytes + onehot_bytes + cols_bytes + io_bytes + (4 << 20)
    vmem_limit = min(vmem_cap, max(32 * 1024 * 1024, est))

    cost = pl.CostEstimate(
        flops=2 * F * (n_users + n_movies) * Bp,
        transcendentals=0,
        bytes_accessed=table_bytes + 3 * Bp * 4,
    )

    out = pl.pallas_call(
        mf_kernel,
        out_shape=jax.ShapeDtypeStruct((1, Bp), jnp.float32),
        grid_spec=pltpu.PrefetchScalarGridSpec(
            num_scalar_prefetch=0,
            grid=grid,
            in_specs=[
                pl.BlockSpec((1, TB), lambda i: (0, i)),          # user ids tile
                pl.BlockSpec((1, TB), lambda i: (0, i)),          # movie ids tile
                pl.BlockSpec((F, n_users), lambda i: (0, 0),      # user table (resident,
                             pipeline_mode=pl.Buffered(1)),       #  single-buffered)
                pl.BlockSpec((F, n_movies), lambda i: (0, 0),     # movie table (resident,
                             pipeline_mode=pl.Buffered(1)),       #  single-buffered)
            ],
            out_specs=pl.BlockSpec((1, TB), lambda i: (0, i)),    # lane-dense output
        ),
        compiler_params=pltpu.CompilerParams(
            dimension_semantics=("parallel",),
            vmem_limit_bytes=int(vmem_limit),
        ),
        cost_estimate=cost,
    )(uid2, mid2, utab_t, mtab_t)

    return out[0, :B]


def _reference(user_ids, movie_ids, user_factors, movie_factors):
    return jnp.sum(user_factors[user_ids] * movie_factors[movie_ids], axis=1)


if __name__ == "__main__":
    key = jax.random.PRNGKey(0)

    # --- Check 1: tiny shapes (single tile, full-extent block) ----------------
    n_users, n_movies, n_factors = 16, 24, 32
    batch = 8
    k_u, k_m, k_ui, k_mi, key = jax.random.split(key, 5)

    user_factors = jax.random.uniform(
        k_u, (n_users, n_factors), dtype=jnp.float32, minval=0.0, maxval=0.5)
    movie_factors = jax.random.uniform(
        k_m, (n_movies, n_factors), dtype=jnp.float32, minval=0.0, maxval=0.5)
    user_ids = jax.random.randint(k_ui, (batch,), 0, n_users, dtype=jnp.int32)
    movie_ids = jax.random.randint(k_mi, (batch,), 0, n_movies, dtype=jnp.int32)

    out = matrix_factorization_forward(user_ids, movie_ids, user_factors, movie_factors)
    out = jax.block_until_ready(out)
    ref = _reference(user_ids, movie_ids, user_factors, movie_factors)
    assert out.shape == (batch,)
    # bf16 table rounding on the MXU path -> ~1% relative tolerance vs f32 ref.
    assert jnp.allclose(out, ref, atol=1e-2, rtol=2e-2), (out, ref)

    # --- Check 2: multi-tile grid with padding (module default n_factors=20) --
    n_users2, n_movies2, n_factors2 = 40, 56, 20
    batch2 = 300  # > 256 -> TB=128, padded to 384, grid=(3,)
    k_u2, k_m2, k_ui2, k_mi2, key = jax.random.split(key, 5)

    user_factors2 = jax.random.uniform(
        k_u2, (n_users2, n_factors2), dtype=jnp.float32, minval=0.0, maxval=0.5)
    movie_factors2 = jax.random.uniform(
        k_m2, (n_movies2, n_factors2), dtype=jnp.float32, minval=0.0, maxval=0.5)
    user_ids2 = jax.random.randint(k_ui2, (batch2,), 0, n_users2, dtype=jnp.int32)
    movie_ids2 = jax.random.randint(k_mi2, (batch2,), 0, n_movies2, dtype=jnp.int32)

    out2 = matrix_factorization_forward(
        user_ids2, movie_ids2, user_factors2, movie_factors2)
    out2 = jax.block_until_ready(out2)
    ref2 = _reference(user_ids2, movie_ids2, user_factors2, movie_factors2)
    assert out2.shape == (batch2,)
    assert jnp.allclose(out2, ref2, atol=1e-2, rtol=2e-2), (out2, ref2)

    print("KERNEL_OK")
</pallas_src>

<mosaic_0001>
module attributes {stable_mosaic.version = 11 : i64} {
  func.func @mf_kernel(%arg0: i32, %arg1: memref<1x8xi32, #tpu.memory_space<vmem>>, %arg2: memref<1x8xi32, #tpu.memory_space<vmem>>, %arg3: memref<32x16xbf16, #tpu.memory_space<vmem>>, %arg4: memref<32x24xbf16, #tpu.memory_space<vmem>>, %arg5: memref<1x8xf32, #tpu.memory_space<vmem>>) attributes {dimension_semantics = [#tpu.dimension_semantics<parallel>], iteration_bounds = array<i64: 1>, scalar_prefetch = 0 : i64, scratch_operands = 0 : i64, tpu.core_type = #tpu.core_type<tc>, window_params = [{transform_indices = @transform_0, window_bounds = array<i64: 1, 8>}, {transform_indices = @transform_1, window_bounds = array<i64: 1, 8>}, {pipeline_mode = #tpu.pipeline_mode<synchronous>, transform_indices = @transform_2, window_bounds = array<i64: 32, 16>}, {pipeline_mode = #tpu.pipeline_mode<synchronous>, transform_indices = @transform_3, window_bounds = array<i64: 32, 24>}, {transform_indices = @transform_4, window_bounds = array<i64: 1, 8>}]} {
    %c0 = arith.constant 0 : index
    %c0_0 = arith.constant 0 : index
    %0 = vector.load %arg1[%c0, %c0_0] : memref<1x8xi32, #tpu.memory_space<vmem>>, vector<1x8xi32>
    %c0_1 = arith.constant 0 : index
    %c0_2 = arith.constant 0 : index
    %1 = vector.load %arg2[%c0_1, %c0_2] : memref<1x8xi32, #tpu.memory_space<vmem>>, vector<1x8xi32>
    %2 = tpu.iota {dimensions = array<i32: 0>} : vector<16x8xi32>
    %3 = vector.broadcast %0 : vector<1x8xi32> to vector<16x8xi32>
    %4 = arith.cmpi eq, %2, %3 : vector<16x8xi32>
    %5 = arith.extui %4 : vector<16x8xi1> to vector<16x8xi32>
    %6 = arith.sitofp %5 : vector<16x8xi32> to vector<16x8xf32>
    %7 = arith.truncf %6 : vector<16x8xf32> to vector<16x8xbf16>
    %8 = tpu.iota {dimensions = array<i32: 0>} : vector<24x8xi32>
    %9 = vector.broadcast %1 : vector<1x8xi32> to vector<24x8xi32>
    %10 = arith.cmpi eq, %8, %9 : vector<24x8xi32>
    %11 = arith.extui %10 : vector<24x8xi1> to vector<24x8xi32>
    %12 = arith.sitofp %11 : vector<24x8xi32> to vector<24x8xf32>
    %13 = arith.truncf %12 : vector<24x8xf32> to vector<24x8xbf16>
    %c0_3 = arith.constant 0 : index
    %c0_4 = arith.constant 0 : index
    %14 = vector.load %arg3[%c0_3, %c0_4] : memref<32x16xbf16, #tpu.memory_space<vmem>>, vector<32x16xbf16>
    %cst = arith.constant dense<0.000000e+00> : vector<32x8xf32>
    %15 = tpu.matmul %14, %7, %cst {dimension_numbers = #tpu.dot_dimension_numbers<[1], [0], [0], [1], [0, 0, 1, 1], [], []>} : vector<32x16xbf16>, vector<16x8xbf16>, vector<32x8xf32> -> vector<32x8xf32>
    %c0_5 = arith.constant 0 : index
    %c0_6 = arith.constant 0 : index
    %16 = vector.load %arg4[%c0_5, %c0_6] : memref<32x24xbf16, #tpu.memory_space<vmem>>, vector<32x24xbf16>
    %cst_7 = arith.constant dense<0.000000e+00> : vector<32x8xf32>
    %17 = tpu.matmul %16, %13, %cst_7 {dimension_numbers = #tpu.dot_dimension_numbers<[1], [0], [0], [1], [0, 0, 1, 1], [], []>} : vector<32x24xbf16>, vector<24x8xbf16>, vector<32x8xf32> -> vector<32x8xf32>
    %18 = arith.mulf %15, %17 : vector<32x8xf32>
    %cst_8 = arith.constant dense<0.000000e+00> : vector<8xf32>
    %19 = vector.multi_reduction <add>, %18, %cst_8 [0] : vector<32x8xf32> to vector<8xf32>
    %20 = vector.shape_cast %19 : vector<8xf32> to vector<1x8xf32>
    %c0_9 = arith.constant 0 : index
    %c0_10 = arith.constant 0 : index
    %21 = vector.load %arg5[%c0_9, %c0_10] : memref<1x8xf32, #tpu.memory_space<vmem>>, vector<1x8xf32>
    tpu.vector_store %arg5[%c0_9, %c0_10], %20 {strides = array<i32>} : memref<1x8xf32, #tpu.memory_space<vmem>>, vector<1x8xf32>,
    return
  }
  func.func @transform_0(%arg0: i32) -> (i32, i32) {
    %c0_i32 = arith.constant 0 : i32
    %c0_i32_0 = arith.constant 0 : i32
    return %c0_i32, %arg0 : i32, i32
  }
  func.func @transform_1(%arg0: i32) -> (i32, i32) {
    %c0_i32 = arith.constant 0 : i32
    %c0_i32_0 = arith.constant 0 : i32
    return %c0_i32, %arg0 : i32, i32
  }
  func.func @transform_2(%arg0: i32) -> (i32, i32) {
    %c0_i32 = arith.constant 0 : i32
    %c0_i32_0 = arith.constant 0 : i32
    %c0_i32_1 = arith.constant 0 : i32
    return %c0_i32, %c0_i32_0 : i32, i32
  }
  func.func @transform_3(%arg0: i32) -> (i32, i32) {
    %c0_i32 = arith.constant 0 : i32
    %c0_i32_0 = arith.constant 0 : i32
    %c0_i32_1 = arith.constant 0 : i32
    return %c0_i32, %c0_i32_0 : i32, i32
  }
  func.func @transform_4(%arg0: i32) -> (i32, i32) {
    %c0_i32 = arith.constant 0 : i32
    %c0_i32_0 = arith.constant 0 : i32
    return %c0_i32, %arg0 : i32, i32
  }
}

</mosaic_0001>

<llo_original>
// kernel: tpu_custom_call.1
$region0: #{tpu_custom_call.1}
  #allocation0 [shape = 'u32[]', space=smem, size = 0x4, offset = 0x4, fixed_abs, tag = 'smem constant byte address 0x4 - core index']
  #allocation1 [shape = 'u32[72,128]{1,0:T(1,128)}', space=vmem, size = 0x9000, scoped, tag = 'internal scratch']
  %s0 = inlined_call_operand.vmem [shape: s32[1,8], index: 0, kind: input, shape index: {}]
  %s1 = inlined_call_operand.vmem [shape: s32[1,8], index: 1, kind: input, shape index: {}]
  %s2 = inlined_call_operand.vmem [shape: bf16[32,16], index: 2, kind: input, shape index: {}]
  %s3 = inlined_call_operand.vmem [shape: bf16[32,24], index: 3, kind: input, shape index: {}]
  %s4 = inlined_call_operand.hbm [shape: f32[1,8], index: 4, kind: output, shape index: {}]
  %s5 = sld [smem:[#allocation0]]
  $region26: #{tpu_custom_call.1} parent=0
    _
  %s7 = ssub.s32 1, %s5
  %s8 = scalar_select 0, %s7, %s5
  $region1: #{tpu_custom_call.1} parent=0
    #allocation2 [shape = 'u8[512]{0}', space=vmem, size = 0x400, scoped, tag = 'output window, operand 0, single buffered']
    #allocation3 [shape = 's32[1]{0}', space=sflag, size = 0x4, scoped, tag = 'scoped memory for tpu_custom_call.1']
    %9 = vsyncpa [#allocation3], 0
    // Predicated region
    $region2: #{tpu_custom_call.1} parent=1 // pred_check
      _
    $region3: #{tpu_custom_call.1} parent=1 // pred_check_branch
      %11 = sbr.rel (0) target = $region5
    $region4: #{tpu_custom_call.1} parent=1 // pred_region
      _
    $region5: #{tpu_custom_call.1} parent=1 // pred_fallthru
      _
    // Predicated region
    $region6: #{tpu_custom_call.1} parent=1 // pred_check
      _
    $region7: #{tpu_custom_call.1} parent=1 // pred_check_branch
      %13 = sbr.rel (0) target = $region9
    $region8: #{tpu_custom_call.1} parent=1 // pred_region
      _
    $region9: #{tpu_custom_call.1} parent=1 // pred_fallthru
      _
    // Predicated region
    $region10: #{tpu_custom_call.1} parent=1 // pred_check
      _
    $region11: #{tpu_custom_call.1} parent=1 // pred_check_branch
      %15 = sbr.rel (0) target = $region13
    $region12: #{tpu_custom_call.1} parent=1 // pred_region
      _
    $region13: #{tpu_custom_call.1} parent=1 // pred_fallthru
      _
    // Predicated region
    $region14: #{tpu_custom_call.1} parent=1 // pred_check
      _
    $region15: #{tpu_custom_call.1} parent=1 // pred_check_branch
      %17 = sbr.rel (0) target = $region17
    $region16: #{tpu_custom_call.1} parent=1 // pred_region
      _
    $region17: #{tpu_custom_call.1} parent=1 // pred_fallthru
      _
    %v19 = vld [vmem:[%s0] sm:$0x1]
    %v20 = vld [vmem:[%s1] sm:$0x1]
    %v21 = vlaneseq
    %v22 = vshrl.u32 %v21, 7
    %v23 = vadd.s32 %v22, 8
    %v24 = vperm.slane %v19, 0
    %vm25 = vcmp.eq.s32.totalorder %v22, %v24
    %vm26 = vcmp.eq.s32.totalorder %v23, %v24
    %v27 = vsel %vm25, 1, 0
    %v28 = vsel %vm26, 1, 0
    %v29 = vcvt.s32.f32 %v27
    %v30 = vcvt.s32.f32 %v28
    %v31 = vpack.c.bf16 %v30, %v29
    %v32 = vadd.s32 %v22, 16
    %v33 = vperm.slane %v20, 0
    %vm34 = vcmp.eq.s32.totalorder %v22, %v33
    %vm35 = vcmp.eq.s32.totalorder %v23, %v33
    %vm36 = vcmp.eq.s32.totalorder %v32, %v33
    %v37 = vsel %vm34, 1, 0
    %v38 = vsel %vm35, 1, 0
    %v39 = vsel %vm36, 1, 0
    %v40 = vcvt.s32.f32 %v37
    %v41 = vcvt.s32.f32 %v38
    %v42 = vcvt.s32.f32 %v39
    %v43 = vpack.c.bf16 %v41, %v40
    %v44 = vpack.c.bf16 %v42, %v42
    %v45 = vld [vmem:[%s2] sm:$0xf]
    %v46 = vld [vmem:[%s2 + $0x4] sm:$0xf]
    %v47 = vld [vmem:[%s2 + $0x8] sm:$0xf]
    %v48 = vld [vmem:[%s2 + $0xc] sm:$0xf]
    %v53 = vunpack.c.l.b16 %v45
    %v54 = vunpack.c.l.b16 %v46
    %v55 = vunpack.c.l.b16 %v47
    %v56 = vunpack.c.l.b16 %v48
    %v57 = vpack.c.b16 %v54, %v53
    %v58 = vpack.c.b16 %v56, %v55
    %vm59 = vcmask 130048
    %v61 = vsel %vm59, %v57, 0
    %v64 = vsel %vm59, %v58, 0
    %66 = vmatpush.bf16.msra.mxu0 0
    %67 = vmatpush.bf16.msra.mxu0 0
    %68 = vmatpush.bf16.msra.mxu0 0
    %69 = vmatpush.bf16.msra.mxu0 0
    %70 = vmatpush.bf16.msra.mxu0 0
    %71 = vmatpush.bf16.msra.mxu0 0
    %72 = vmatpush.bf16.msra.mxu0 0
    %73 = vmatpush.bf16.msra.mxu0 %v31
    %74 = vmatmul.bf16.gmra.mxu0 %v61
    %v75 = vpop.f32.mrf.mxu0
    %v76 = vadd.f32 0.0, %v75
    %v77 = vpop.f32.mrf.mxu0
    %v78 = vadd.f32 0.0, %v77
    %79 = vmatmul.bf16.gmra.mxu0 %v64
    %v80 = vpop.f32.mrf.mxu0
    %v81 = vadd.f32 0.0, %v80
    %v82 = vpop.f32.mrf.mxu0
    %v83 = vadd.f32 0.0, %v82
    %84 = vdwg.mxu0
    %v85 = vld [vmem:[%s3] sm:$0xf]
    %v86 = vld [vmem:[%s3 + $0x4] sm:$0xf]
    %v87 = vld [vmem:[%s3 + $0x8] sm:$0xf]
    %v88 = vld [vmem:[%s3 + $0xc] sm:$0xf]
    %v93 = vunpack.c.l.b16 %v85
    %v94 = vunpack.c.l.b16 %v86
    %v95 = vunpack.c.l.b16 %v87
    %v96 = vunpack.c.l.b16 %v88
    %v97 = vpack.c.b16 %v94, %v93
    %v98 = vpack.c.b16 %v96, %v95
    %vm99 = vcmask 195584
    %v101 = vsel %vm99, %v97, 0
    %v104 = vsel %vm99, %v98, 0
    %vm106 = vcmask 1043456
    %v108 = vsel %vm106, %v44, 0
    %110 = vmatpush.bf16.msra.mxu0 0
    %111 = vmatpush.bf16.msra.mxu0 0
    %112 = vmatpush.bf16.msra.mxu0 0
    %113 = vmatpush.bf16.msra.mxu0 0
    %114 = vmatpush.bf16.msra.mxu0 0
    %115 = vmatpush.bf16.msra.mxu0 0
    %116 = vmatpush.bf16.msra.mxu0 %v108
    %117 = vmatpush.bf16.msra.mxu0 %v43
    %118 = vmatmul.bf16.gmra.mxu0 %v101
    %v119 = vpop.f32.mrf.mxu0
    %v120 = vadd.f32 0.0, %v119
    %v121 = vpop.f32.mrf.mxu0
    %v122 = vadd.f32 0.0, %v121
    %123 = vmatmul.bf16.gmra.mxu0 %v104
    %v124 = vpop.f32.mrf.mxu0
    %v125 = vadd.f32 0.0, %v124
    %v126 = vpop.f32.mrf.mxu0
    %v127 = vadd.f32 0.0, %v126
    %128 = vdwg.mxu0
    %v129 = vmul.f32 %v76, %v120
    %v130 = vmul.f32 %v78, %v122
    %v131 = vmul.f32 %v81, %v125
    %v132 = vmul.f32 %v83, %v127
    %vm133 = vcmask 64512
    %v134 = vsel %vm133, %v129, 0.0
    %v135 = vsel %vm133, %v130, 0.0
    %v136 = vadd.f32 %v134, %v135
    %v137 = vsel %vm133, %v131, 0.0
    %v138 = vadd.f32 %v136, %v137
    %v139 = vsel %vm133, %v132, 0.0
    %v140 = vadd.f32 %v138, %v139
    %v141 = vrot.slane %v140, 4
    %v142 = vadd.f32 %v140, %v141
    %v143 = vrot.slane %v142, 2
    %v144 = vadd.f32 %v142, %v143
    %v145 = vrot.slane %v144, 1
    %v146 = vadd.f32 %v144, %v145
    %vm147 = vcmask 57344
    %148 = vst.msk [vmem:[#allocation2] sm:$0x1] %vm147, %v146
    // Predicated region
    $region18: #{tpu_custom_call.1} parent=1 // pred_check
      _
    $region19: #{tpu_custom_call.1} parent=1 // pred_check_branch
      %150 = sbr.rel (0) target = $region21
    $region20: #{tpu_custom_call.1} parent=1 // pred_region
      %152 = vsyncadd [#allocation3], 0
      %s154 = sshll.u32 [#allocation2], 4
      %s155 = int_to_ptr.vmem [resolvable:$true] %s154
      %s156 = sshll.u32 %s4, 4
      %s157 = int_to_ptr.hbm [resolvable:$true] %s156
      %159 = dma.vmem_to_hbm [thread:$0]  %s155, 16, %s157, [#allocation3]
    $region21: #{tpu_custom_call.1} parent=1 // pred_fallthru
      _
    // Predicated region
    $region22: #{tpu_custom_call.1} parent=1 // pred_check
      _
    $region23: #{tpu_custom_call.1} parent=1 // pred_check_branch
      %161 = sbr.rel (0) target = $region25
    $region24: #{tpu_custom_call.1} parent=1 // pred_region
      %163 = dma.done [#allocation3], 16
    $region25: #{tpu_custom_call.1} parent=1 // pred_fallthru
      _
    %164 = vsyncpa [#allocation3], 1

</llo_original>
